<compile_context>
chip_gen: v7x
topology: tpu7x:2x2x1
jax: 0.10.0
libtpu: 0.0.40
codegen_flags: <defaults>
</compile_context>

<pallas_src>
import jax
import jax.numpy as jnp
from jax.experimental import pallas as pl
from jax.experimental.pallas import tpu as pltpu

HIDDEN = 256


def _round_up(x, m):
    return ((x + m - 1) // m) * m


def _choose_tile(batch, tile_b):
    """Padding-aware batch tile (tb) and number of grid steps."""
    num_tiles = max(1, -(-batch // tile_b))
    # v7x has 2 TensorCores: give a "parallel" grid >= 2 steps once the batch
    # is big enough that each half-tile still amortizes the per-step overhead.
    if num_tiles == 1 and batch > 1024:
        num_tiles = 2
    tb = -(-batch // num_tiles)
    tb8 = _round_up(tb, 8)        # sublane alignment, minimal padding
    tb256 = _round_up(tb, 256)    # full MXU row passes on v6e/v7x
    # Prefer the 256-multiple only when it adds <= ~6% padded rows.
    if (tb256 - tb8) * num_tiles * 16 <= batch:
        tb = tb256
    else:
        tb = tb8
    return tb, num_tiles


def critic_kernel(x_ref, w1_ref, b1_ref, w2_ref, b2_ref, w3_ref, b3_ref, o_ref):
    # fc1: (tb, K) @ (K, 256) -- bf16 operands (cast in wrapper), f32 MXU acc.
    h1 = jnp.dot(x_ref[...], w1_ref[...], preferred_element_type=jnp.float32)
    h1 = jnp.maximum(h1 + b1_ref[...], 0.0)          # bias + ReLU in f32 (VPU)

    # fc2: (tb, 256) @ (256, 256)
    h2 = jnp.dot(h1.astype(jnp.bfloat16), w2_ref[...],
                 preferred_element_type=jnp.float32)
    h2 = jnp.maximum(h2 + b2_ref[...], 0.0)

    # fc3 (256 -> 1): VPU multiply + lane reduce; relayout the per-row scalars
    # into a lane-dense (1, 1, tb) row so the store is unmasked and the
    # output writeback DMA is contiguous.
    q = jnp.sum(h2 * w3_ref[...], axis=-1) + b3_ref[0, 0]   # (tb,)
    o_ref[...] = q.reshape(1, 1, -1).astype(o_ref.dtype)


def critic_forward(s, a, params, *, tile_b=2048):
    """Pallas forward pass. s: (B, S) f32, a: (B, A) f32 -> (B, 1) f32."""
    w1, b1, w2, b2, w3_row, b3 = params
    B = s.shape[0]
    K = s.shape[1] + a.shape[1]

    # cat([s, a], dim=1) + bf16 cast in the wrapper: fc1 becomes one MXU pass
    # and the per-tile activation DMA is half the bytes.  (The matmul would
    # truncate to bf16 anyway, so numerics are unchanged.)
    x = jnp.concatenate([s, a], axis=1).astype(jnp.bfloat16)

    tb, num_tiles = _choose_tile(B, tile_b)
    b_pad = tb * num_tiles
    if b_pad != B:
        x = jnp.pad(x, ((0, b_pad - B), (0, 0)))

    const2 = lambda i: (0, 0)

    flops = 2 * B * (K * HIDDEN + HIDDEN * HIDDEN + HIDDEN)
    bytes_accessed = (x.size * x.dtype.itemsize
                      + w1.size * w1.dtype.itemsize
                      + w2.size * w2.dtype.itemsize
                      + (b1.size + b2.size + w3_row.size + b3.size) * 4
                      + b_pad * 4)

    out = pl.pallas_call(
        critic_kernel,
        out_shape=jax.ShapeDtypeStruct((num_tiles, 1, tb), jnp.float32),
        grid=(num_tiles,),
        in_specs=[
            pl.BlockSpec((tb, K), lambda i: (i, 0)),            # x tile (pipelined)
            pl.BlockSpec((K, HIDDEN), const2),                  # w1 (VMEM-resident)
            pl.BlockSpec((1, HIDDEN), const2),                  # b1
            pl.BlockSpec((HIDDEN, HIDDEN), const2),             # w2 (VMEM-resident)
            pl.BlockSpec((1, HIDDEN), const2),                  # b2
            pl.BlockSpec((1, HIDDEN), const2),                  # w3 as a lane row
            pl.BlockSpec(memory_space=pltpu.MemorySpace.SMEM),  # b3 scalar
        ],
        out_specs=pl.BlockSpec((1, 1, tb), lambda i: (i, 0, 0)),  # lane-dense
        compiler_params=pltpu.CompilerParams(
            dimension_semantics=("parallel",),
            vmem_limit_bytes=32 * 1024 * 1024),
        cost_estimate=pl.CostEstimate(
            flops=flops, transcendentals=0, bytes_accessed=bytes_accessed),
    )(x, w1, b1, w2, b2, w3_row, b3)
    return out.reshape(b_pad, 1)[:B]


def init_critic_params(key, state_dim, action_dim, hidden=HIDDEN):
    """Init matching torch.nn.Linear default: U(-k, k), k = 1/sqrt(fan_in).
    Weights stored pre-transposed as (in, out).  fc1/fc2 weights kept in bf16
    (MXU-native, deliberate precision choice); fc3 weight + all biases stay
    f32 (applied on the VPU)."""
    def linear(key, fan_in, fan_out):
        kw, kb = jax.random.split(key)
        k = 1.0 / jnp.sqrt(float(fan_in))
        w = jax.random.uniform(kw, (fan_in, fan_out), jnp.float32, -k, k)
        b = jax.random.uniform(kb, (1, fan_out), jnp.float32, -k, k)
        return w, b

    k1, k2, k3 = jax.random.split(key, 3)
    w1, b1 = linear(k1, state_dim + action_dim, hidden)
    w2, b2 = linear(k2, hidden, hidden)
    w3, b3 = linear(k3, hidden, 1)
    w3_row = w3.reshape(1, hidden)        # (1, 256) lane row for the VPU reduce
    return (w1.astype(jnp.bfloat16), b1,
            w2.astype(jnp.bfloat16), b2,
            w3_row, b3)                   # b3 is (1, 1) f32


def critic_reference_bf16(s, a, params):
    """Plain-JAX reference with the same bf16-matmul / f32-accumulate math."""
    w1, b1, w2, b2, w3_row, b3 = params
    x = jnp.concatenate([s, a], axis=1).astype(jnp.bfloat16)
    h1 = jnp.maximum(
        jnp.dot(x, w1, preferred_element_type=jnp.float32) + b1, 0.0)
    h2 = jnp.maximum(
        jnp.dot(h1.astype(jnp.bfloat16), w2,
                preferred_element_type=jnp.float32) + b2, 0.0)
    return jnp.sum(h2 * w3_row, axis=-1, keepdims=True) + b3[0, 0]


def critic_reference_f32(s, a, params):
    """True f32 reference (same quantized weights, f32 activations/matmuls)."""
    w1, b1, w2, b2, w3_row, b3 = params
    x = jnp.concatenate([s, a], axis=1)
    h1 = jnp.maximum(
        jnp.dot(x, w1.astype(jnp.float32),
                precision=jax.lax.Precision.HIGHEST) + b1, 0.0)
    h2 = jnp.maximum(
        jnp.dot(h1, w2.astype(jnp.float32),
                precision=jax.lax.Precision.HIGHEST) + b2, 0.0)
    return jnp.sum(h2 * w3_row, axis=-1, keepdims=True) + b3[0, 0]


if __name__ == "__main__":
    key = jax.random.PRNGKey(0)
    k_param, k_s, k_a = jax.random.split(key, 3)

    batch = 2
    state_dim = 8      # in_space.shape[0]
    action_dim = 4     # out_space.shape[0]

    params = init_critic_params(k_param, state_dim, action_dim)
    s = jax.random.normal(k_s, (batch, state_dim), jnp.float32)
    a = jax.random.normal(k_a, (batch, action_dim), jnp.float32)

    out = jax.block_until_ready(critic_forward(s, a, params))
    ref_bf16 = critic_reference_bf16(s, a, params)
    ref_f32 = critic_reference_f32(s, a, params)

    assert out.shape == (batch, 1), out.shape
    # Tight check against the bf16-matched reference; looser check against the
    # true f32 reference (bf16 matmul operands are a deliberate choice).
    assert jnp.allclose(out, ref_bf16, atol=2e-3, rtol=2e-3), (out, ref_bf16)
    assert jnp.allclose(out, ref_f32, atol=5e-2, rtol=5e-2), (out, ref_f32)

    # TODO(synk): optim.Adam from the PyTorch module is optimizer state, not
    # part of the forward pass, and is intentionally not implemented here.
    print("KERNEL_OK")
</pallas_src>

<mosaic_0001>
module attributes {stable_mosaic.version = 11 : i64} {
  func.func @critic_kernel(%arg0: i32, %arg1: memref<8x12xbf16, #tpu.memory_space<vmem>>, %arg2: memref<12x256xbf16, #tpu.memory_space<vmem>>, %arg3: memref<1x256xf32, #tpu.memory_space<vmem>>, %arg4: memref<256x256xbf16, #tpu.memory_space<vmem>>, %arg5: memref<1x256xf32, #tpu.memory_space<vmem>>, %arg6: memref<1x256xf32, #tpu.memory_space<vmem>>, %arg7: memref<1x1xf32, #tpu.memory_space<smem>>, %arg8: memref<1x1x8xf32, #tpu.memory_space<vmem>>) attributes {dimension_semantics = [#tpu.dimension_semantics<parallel>], iteration_bounds = array<i64: 1>, scalar_prefetch = 0 : i64, scratch_operands = 0 : i64, tpu.core_type = #tpu.core_type<tc>, window_params = [{transform_indices = @transform_0, window_bounds = array<i64: 8, 12>}, {pipeline_mode = #tpu.pipeline_mode<synchronous>, transform_indices = @transform_1, window_bounds = array<i64: 12, 256>}, {pipeline_mode = #tpu.pipeline_mode<synchronous>, transform_indices = @transform_2, window_bounds = array<i64: 1, 256>}, {pipeline_mode = #tpu.pipeline_mode<synchronous>, transform_indices = @transform_3, window_bounds = array<i64: 256, 256>}, {pipeline_mode = #tpu.pipeline_mode<synchronous>, transform_indices = @transform_4, window_bounds = array<i64: 1, 256>}, {pipeline_mode = #tpu.pipeline_mode<synchronous>, transform_indices = @transform_5, window_bounds = array<i64: 1, 256>}, {transform_indices = @transform_6, window_bounds = array<i64: 1, 1>}, {transform_indices = @transform_7, window_bounds = array<i64: 1, 1, 8>}]} {
    %c0 = arith.constant 0 : index
    %c0_0 = arith.constant 0 : index
    %0 = vector.load %arg1[%c0, %c0_0] : memref<8x12xbf16, #tpu.memory_space<vmem>>, vector<8x12xbf16>
    %c0_1 = arith.constant 0 : index
    %c0_2 = arith.constant 0 : index
    %1 = vector.load %arg2[%c0_1, %c0_2] : memref<12x256xbf16, #tpu.memory_space<vmem>>, vector<12x256xbf16>
    %cst = arith.constant dense<0.000000e+00> : vector<8x256xf32>
    %2 = tpu.matmul %0, %1, %cst {dimension_numbers = #tpu.dot_dimension_numbers<[1], [0], [0], [1], [0, 0, 1, 1], [], []>} : vector<8x12xbf16>, vector<12x256xbf16>, vector<8x256xf32> -> vector<8x256xf32>
    %c0_3 = arith.constant 0 : index
    %c0_4 = arith.constant 0 : index
    %3 = vector.load %arg3[%c0_3, %c0_4] : memref<1x256xf32, #tpu.memory_space<vmem>>, vector<1x256xf32>
    %4 = vector.broadcast %3 : vector<1x256xf32> to vector<8x256xf32>
    %5 = arith.addf %2, %4 : vector<8x256xf32>
    %cst_5 = arith.constant 0.000000e+00 : f32
    %6 = vector.broadcast %cst_5 : f32 to vector<8x256xf32>
    %7 = arith.maximumf %5, %6 : vector<8x256xf32>
    %8 = arith.truncf %7 : vector<8x256xf32> to vector<8x256xbf16>
    %c0_6 = arith.constant 0 : index
    %c0_7 = arith.constant 0 : index
    %9 = vector.load %arg4[%c0_6, %c0_7] : memref<256x256xbf16, #tpu.memory_space<vmem>>, vector<256x256xbf16>
    %cst_8 = arith.constant dense<0.000000e+00> : vector<8x256xf32>
    %10 = tpu.matmul %8, %9, %cst_8 {dimension_numbers = #tpu.dot_dimension_numbers<[1], [0], [0], [1], [0, 0, 1, 1], [], []>} : vector<8x256xbf16>, vector<256x256xbf16>, vector<8x256xf32> -> vector<8x256xf32>
    %c0_9 = arith.constant 0 : index
    %c0_10 = arith.constant 0 : index
    %11 = vector.load %arg5[%c0_9, %c0_10] : memref<1x256xf32, #tpu.memory_space<vmem>>, vector<1x256xf32>
    %12 = vector.broadcast %11 : vector<1x256xf32> to vector<8x256xf32>
    %13 = arith.addf %10, %12 : vector<8x256xf32>
    %cst_11 = arith.constant 0.000000e+00 : f32
    %14 = vector.broadcast %cst_11 : f32 to vector<8x256xf32>
    %15 = arith.maximumf %13, %14 : vector<8x256xf32>
    %c0_12 = arith.constant 0 : index
    %c0_13 = arith.constant 0 : index
    %16 = vector.load %arg6[%c0_12, %c0_13] : memref<1x256xf32, #tpu.memory_space<vmem>>, vector<1x256xf32>
    %17 = vector.broadcast %16 : vector<1x256xf32> to vector<8x256xf32>
    %18 = arith.mulf %15, %17 : vector<8x256xf32>
    %cst_14 = arith.constant dense<0.000000e+00> : vector<8xf32>
    %19 = vector.multi_reduction <add>, %18, %cst_14 [1] : vector<8x256xf32> to vector<8xf32>
    %c0_15 = arith.constant 0 : index
    %c0_16 = arith.constant 0 : index
    %20 = memref.load %arg7[%c0_15, %c0_16] : memref<1x1xf32, #tpu.memory_space<smem>>
    %21 = vector.broadcast %20 : f32 to vector<8xf32>
    %22 = arith.addf %19, %21 : vector<8xf32>
    %23 = vector.shape_cast %22 : vector<8xf32> to vector<1x1x8xf32>
    %c0_17 = arith.constant 0 : index
    %c0_18 = arith.constant 0 : index
    %c0_19 = arith.constant 0 : index
    %24 = vector.load %arg8[%c0_17, %c0_18, %c0_19] : memref<1x1x8xf32, #tpu.memory_space<vmem>>, vector<1x1x8xf32>
    tpu.vector_store %arg8[%c0_17, %c0_18, %c0_19], %23 {strides = array<i32>} : memref<1x1x8xf32, #tpu.memory_space<vmem>>, vector<1x1x8xf32>,
    return
  }
  func.func @transform_0(%arg0: i32) -> (i32, i32) {
    %c0_i32 = arith.constant 0 : i32
    %c0_i32_0 = arith.constant 0 : i32
    return %arg0, %c0_i32 : i32, i32
  }
  func.func @transform_1(%arg0: i32) -> (i32, i32) {
    %c0_i32 = arith.constant 0 : i32
    %c0_i32_0 = arith.constant 0 : i32
    %c0_i32_1 = arith.constant 0 : i32
    return %c0_i32, %c0_i32_0 : i32, i32
  }
  func.func @transform_2(%arg0: i32) -> (i32, i32) {
    %c0_i32 = arith.constant 0 : i32
    %c0_i32_0 = arith.constant 0 : i32
    %c0_i32_1 = arith.constant 0 : i32
    return %c0_i32, %c0_i32_0 : i32, i32
  }
  func.func @transform_3(%arg0: i32) -> (i32, i32) {
    %c0_i32 = arith.constant 0 : i32
    %c0_i32_0 = arith.constant 0 : i32
    %c0_i32_1 = arith.constant 0 : i32
    return %c0_i32, %c0_i32_0 : i32, i32
  }
  func.func @transform_4(%arg0: i32) -> (i32, i32) {
    %c0_i32 = arith.constant 0 : i32
    %c0_i32_0 = arith.constant 0 : i32
    %c0_i32_1 = arith.constant 0 : i32
    return %c0_i32, %c0_i32_0 : i32, i32
  }
  func.func @transform_5(%arg0: i32) -> (i32, i32) {
    %c0_i32 = arith.constant 0 : i32
    %c0_i32_0 = arith.constant 0 : i32
    %c0_i32_1 = arith.constant 0 : i32
    return %c0_i32, %c0_i32_0 : i32, i32
  }
  func.func @transform_6(%arg0: i32) -> (i32, i32) {
    %c0_i32 = arith.constant 0 : i32
    %c0_i32_0 = arith.constant 0 : i32
    %c0_i32_1 = arith.constant 0 : i32
    return %c0_i32, %c0_i32_0 : i32, i32
  }
  func.func @transform_7(%arg0: i32) -> (i32, i32, i32) {
    %c0_i32 = arith.constant 0 : i32
    %c0_i32_0 = arith.constant 0 : i32
    %c0_i32_1 = arith.constant 0 : i32
    return %arg0, %c0_i32, %c0_i32_0 : i32, i32, i32
  }
}

</mosaic_0001>

<llo_original>
// kernel: tpu_custom_call.1
$region0: #{tpu_custom_call.1}
  #allocation0 [shape = 'u32[]', space=smem, size = 0x4, offset = 0x4, fixed_abs, tag = 'smem constant byte address 0x4 - core index']
  #allocation1 [shape = 'u32[144,128]{1,0:T(1,128)}', space=vmem, size = 0x12000, scoped, tag = 'internal scratch']
  #allocation2 [shape = 'f32[1,1]{1,0:T(1,128)S(6)}', space=smem, size = 0x200, scoped, tag = 'scoped memory for tpu_custom_call.1']
  %s0 = inlined_call_operand.hbm [shape: bf16[8,12], index: 0, kind: input, shape index: {}]
  %s1 = inlined_call_operand.hbm [shape: bf16[12,256], index: 1, kind: input, shape index: {}]
  %s2 = inlined_call_operand.vmem [shape: f32[1,256], index: 2, kind: input, shape index: {}]
  %s3 = inlined_call_operand.hbm [shape: bf16[256,256], index: 3, kind: input, shape index: {}]
  %s4 = inlined_call_operand.vmem [shape: f32[1,256], index: 4, kind: input, shape index: {}]
  %s5 = inlined_call_operand.vmem [shape: f32[1,256], index: 5, kind: input, shape index: {}]
  %s6 = inlined_call_operand.<no memory space> [shape: f32[1,1], index: 6, kind: input, shape index: {}]
  %s7 = inlined_call_operand.hbm [shape: f32[1,1,8], index: 7, kind: output, shape index: {}]
  %s8 = sld [smem:[#allocation0]]
  $region50: #{tpu_custom_call.1} parent=0
    _
  %s10 = ssub.s32 1, %s8
  %s11 = scalar_select 0, %s10, %s8
  %12 = sst [smem:[#allocation2]] %s6
  $region1: #{tpu_custom_call.1} parent=0
    #allocation3 [shape = 'u8[2048]{0}', space=vmem, size = 0x800, scoped, tag = 'input window, operand 0, single buffered']
    #allocation4 [shape = 's32[1]{0}', space=sflag, size = 0x4, scoped, tag = 'scoped memory for tpu_custom_call.1']
    #allocation5 [shape = 's32[1]{0}', space=sflag, size = 0x4, scoped, tag = 'scoped memory for tpu_custom_call.1']
    #allocation6 [shape = 'u8[8192]{0}', space=vmem, size = 0x2000, scoped, tag = 'input window, operand 1, single buffered']
    #allocation7 [shape = 's32[1]{0}', space=sflag, size = 0x4, scoped, tag = 'scoped memory for tpu_custom_call.1']
    #allocation8 [shape = 'u8[131072]{0}', space=vmem, size = 0x20000, scoped, tag = 'input window, operand 3, single buffered']
    #allocation9 [shape = 'u8[512]{0}', space=vmem, size = 0x400, scoped, tag = 'output window, operand 0, single buffered']
    %13 = vsyncpa [#allocation4], 0
    %14 = vsyncpa [#allocation7], 0
    %15 = vsyncpa [#allocation5], 0
    // Predicated region
    $region2: #{tpu_custom_call.1} parent=1 // pred_check
      _
    $region3: #{tpu_custom_call.1} parent=1 // pred_check_branch
      %17 = sbr.rel (0) target = $region5
    $region4: #{tpu_custom_call.1} parent=1 // pred_region
      %s19 = ssub.s32 64, 64
      %20 = vsyncadd [#allocation4], %s19
      %s22 = sshll.u32 [#allocation3], 4
      %s23 = int_to_ptr.vmem [resolvable:$true] %s22
      %25 = dma.hbm_to_vmem [thread:$0]  %s0, 64, %s23, [#allocation4]
    $region5: #{tpu_custom_call.1} parent=1 // pred_fallthru
      _
    // Predicated region
    $region6: #{tpu_custom_call.1} parent=1 // pred_check
      _
    $region7: #{tpu_custom_call.1} parent=1 // pred_check_branch
      %27 = sbr.rel (0) target = $region9
    $region8: #{tpu_custom_call.1} parent=1 // pred_region
      %s29 = ssub.s32 256, 256
      %30 = vsyncadd [#allocation7], %s29
      %s31 = sshll.u32 [#allocation6], 4
      %s32 = int_to_ptr.vmem [resolvable:$true] %s31
      %37 = dma.hbm_to_vmem [thread:$0]  %s1, 256, %s32, [#allocation7], 128, 128, 8
    $region9: #{tpu_custom_call.1} parent=1 // pred_fallthru
      _
    // Predicated region
    $region10: #{tpu_custom_call.1} parent=1 // pred_check
      _
    $region11: #{tpu_custom_call.1} parent=1 // pred_check_branch
      %39 = sbr.rel (0) target = $region13
    $region12: #{tpu_custom_call.1} parent=1 // pred_region
      _
    $region13: #{tpu_custom_call.1} parent=1 // pred_fallthru
      _
    // Predicated region
    $region14: #{tpu_custom_call.1} parent=1 // pred_check
      _
    $region15: #{tpu_custom_call.1} parent=1 // pred_check_branch
      %41 = sbr.rel (0) target = $region17
    $region16: #{tpu_custom_call.1} parent=1 // pred_region
      %s43 = ssub.s32 4096, 4096
      %44 = vsyncadd [#allocation7], %s43
      %s45 = sshll.u32 [#allocation8], 4
      %s46 = int_to_ptr.vmem [resolvable:$true] %s45
      %51 = dma.hbm_to_vmem [thread:$0]  %s3, 4096, %s46, [#allocation7], 128, 128, 8
    $region17: #{tpu_custom_call.1} parent=1 // pred_fallthru
      _
    // Predicated region
    $region18: #{tpu_custom_call.1} parent=1 // pred_check
      _
    $region19: #{tpu_custom_call.1} parent=1 // pred_check_branch
      %53 = sbr.rel (0) target = $region21
    $region20: #{tpu_custom_call.1} parent=1 // pred_region
      _
    $region21: #{tpu_custom_call.1} parent=1 // pred_fallthru
      _
    // Predicated region
    $region22: #{tpu_custom_call.1} parent=1 // pred_check
      _
    $region23: #{tpu_custom_call.1} parent=1 // pred_check_branch
      %55 = sbr.rel (0) target = $region25
    $region24: #{tpu_custom_call.1} parent=1 // pred_region
      _
    $region25: #{tpu_custom_call.1} parent=1 // pred_fallthru
      _
    // Predicated region
    $region26: #{tpu_custom_call.1} parent=1 // pred_check
      _
    $region27: #{tpu_custom_call.1} parent=1 // pred_check_branch
      %57 = sbr.rel (0) target = $region29
    $region28: #{tpu_custom_call.1} parent=1 // pred_region
      _
    $region29: #{tpu_custom_call.1} parent=1 // pred_fallthru
      _
    // Predicated region
    $region30: #{tpu_custom_call.1} parent=1 // pred_check
      _
    $region31: #{tpu_custom_call.1} parent=1 // pred_check_branch
      %59 = sbr.rel (0) target = $region33
    $region32: #{tpu_custom_call.1} parent=1 // pred_region
      %60 = dma.done [#allocation4], 64
    $region33: #{tpu_custom_call.1} parent=1 // pred_fallthru
      _
    // Predicated region
    $region34: #{tpu_custom_call.1} parent=1 // pred_check
      _
    $region35: #{tpu_custom_call.1} parent=1 // pred_check_branch
      %62 = sbr.rel (0) target = $region37
    $region36: #{tpu_custom_call.1} parent=1 // pred_region
      %63 = dma.done [#allocation7], 256
    $region37: #{tpu_custom_call.1} parent=1 // pred_fallthru
      _
    // Predicated region
    $region38: #{tpu_custom_call.1} parent=1 // pred_check
      _
    $region39: #{tpu_custom_call.1} parent=1 // pred_check_branch
      %65 = sbr.rel (0) target = $region41
    $region40: #{tpu_custom_call.1} parent=1 // pred_region
      %66 = dma.done [#allocation7], 4096
    $region41: #{tpu_custom_call.1} parent=1 // pred_fallthru
      _
    %v68 = vld [vmem:[#allocation3] sm:$0xf]
    %v69 = vld [vmem:[#allocation6] sm:$0xff]
    %v70 = vld [vmem:[#allocation6 + $0x8] sm:$0x33]
    %v71 = vld [vmem:[%s2] sm:$0x3]
    %v73 = vlaneseq
    %v74 = vshrl.u32 %v73, 7
    %v75 = vsub.s32 0, %v74
    %v76 = vrot.slane %v71, %v75
    %v77 = vlaneseq
    %v78 = vshrl.u32 %v77, 7
    %v79 = vsub.s32 1, %v78
    %v80 = vrot.slane %v71, %v79
    %v85 = vunpack.c.l.b16 %v69
    %v86 = vunpack.c.h.b16 %v69
    %v87 = vunpack.c.l.b16 %v70
    %v88 = vunpack.c.h.b16 %v70
    %v89 = vpack.c.b16 %v87, %v85
    %v90 = vpack.c.b16 %v88, %v86
    %vm91 = vcmask 97280
    %v93 = vsel %vm91, %v68, 0
    %vm95 = vcmask 1045504
    %v97 = vsel %vm95, %v89, 0
    %v100 = vsel %vm95, %v90, 0
    %102 = vmatprep.subr.bf16.mxu0 %v100
    %103 = vmatpush1.bf16.msra.mxu0 %v97
    %104 = vmatprep.subr.bf16.mxu0 0
    %105 = vmatpush1.bf16.msra.mxu0 0
    %106 = vmatprep.subr.bf16.mxu0 0
    %107 = vmatpush1.bf16.msra.mxu0 0
    %108 = vmatprep.subr.bf16.mxu0 0
    %109 = vmatpush1.bf16.msra.mxu0 0
    %110 = vmatprep.subr.bf16.mxu0 0
    %111 = vmatpush1.bf16.msra.mxu0 0
    %112 = vmatprep.subr.bf16.mxu0 0
    %113 = vmatpush1.bf16.msra.mxu0 0
    %114 = vmatprep.subr.bf16.mxu0 0
    %115 = vmatpush1.bf16.msra.mxu0 0
    %116 = vmatprep.subr.bf16.mxu0 0
    %117 = vmatpush1.bf16.msra.mxu0 0
    %118 = vmatprep.subr.bf16.mxu0 0
    %119 = vmatpush1.bf16.msra.mxu0 0
    %120 = vmatprep.subr.bf16.mxu0 0
    %121 = vmatpush1.bf16.msra.mxu0 0
    %122 = vmatprep.subr.bf16.mxu0 0
    %123 = vmatpush1.bf16.msra.mxu0 0
    %124 = vmatprep.subr.bf16.mxu0 0
    %125 = vmatpush1.bf16.msra.mxu0 0
    %126 = vmatprep.subr.bf16.mxu0 0
    %127 = vmatpush1.bf16.msra.mxu0 0
    %128 = vmatprep.subr.bf16.mxu0 0
    %129 = vmatpush1.bf16.msra.mxu0 0
    %130 = vmatprep.subr.bf16.mxu0 0
    %131 = vmatpush1.bf16.msra.mxu0 0
    %132 = vmatprep.subr.bf16.mxu0 0
    %133 = vmatpush1.bf16.msra.mxu0 0
    %134 = vmatprep.mubr.bf16.mxu0 0
    %135 = vmatmul.mubr.bf16.gmra.mrb[0].mxu0 %v93
    %v136 = vpop.f32.mrb[0].mxu0
    %v137 = vadd.f32 %v76, %v136
    %v138 = vpop.f32.mrb[0].mxu0
    %v139 = vadd.f32 %v80, %v138
    %v140 = vpop.f32.mrb[0].mxu0
    %v141 = vpop.f32.mrb[0].mxu0
    %142 = vdwg.mxu0
    %v143 = vmax.f32 %v137, 0.0
    %v144 = vmax.f32 %v139, 0.0
    %v145 = vpack.c.bf16 %v143, %v143
    %v146 = vpack.c.bf16 %v144, %v144
    %v147 = vld [vmem:[#allocation8] sm:$0xff]
    %v148 = vld [vmem:[#allocation8 + $0x8] sm:$0xff]
    %v149 = vld [vmem:[#allocation8 + $0x10] sm:$0xff]
    %v150 = vld [vmem:[#allocation8 + $0x18] sm:$0xff]
    %v151 = vld [vmem:[#allocation8 + $0x20] sm:$0xff]
    %v152 = vld [vmem:[#allocation8 + $0x28] sm:$0xff]
    %v153 = vld [vmem:[#allocation8 + $0x30] sm:$0xff]
    %v154 = vld [vmem:[#allocation8 + $0x38] sm:$0xff]
    %v155 = vld [vmem:[#allocation8 + $0x40] sm:$0xff]
    %v156 = vld [vmem:[#allocation8 + $0x48] sm:$0xff]
    %v157 = vld [vmem:[#allocation8 + $0x50] sm:$0xff]
    %v158 = vld [vmem:[#allocation8 + $0x58] sm:$0xff]
    %v159 = vld [vmem:[#allocation8 + $0x60] sm:$0xff]
    %v160 = vld [vmem:[#allocation8 + $0x68] sm:$0xff]
    %v161 = vld [vmem:[#allocation8 + $0x70] sm:$0xff]
    %v162 = vld [vmem:[#allocation8 + $0x78] sm:$0xff]
    %v163 = vld [vmem:[#allocation8 + $0x80] sm:$0xff]
    %v164 = vld [vmem:[#allocation8 + $0x88] sm:$0xff]
    %v165 = vld [vmem:[#allocation8 + $0x90] sm:$0xff]
    %v166 = vld [vmem:[#allocation8 + $0x98] sm:$0xff]
    %v167 = vld [vmem:[#allocation8 + $0xa0] sm:$0xff]
    %v168 = vld [vmem:[#allocation8 + $0xa8] sm:$0xff]
    %v169 = vld [vmem:[#allocation8 + $0xb0] sm:$0xff]
    %v170 = vld [vmem:[#allocation8 + $0xb8] sm:$0xff]
    %v171 = vld [vmem:[#allocation8 + $0xc0] sm:$0xff]
    %v172 = vld [vmem:[#allocation8 + $0xc8] sm:$0xff]
    %v173 = vld [vmem:[#allocation8 + $0xd0] sm:$0xff]
    %v174 = vld [vmem:[#allocation8 + $0xd8] sm:$0xff]
    %v175 = vld [vmem:[#allocation8 + $0xe0] sm:$0xff]
    %v176 = vld [vmem:[#allocation8 + $0xe8] sm:$0xff]
    %v177 = vld [vmem:[#allocation8 + $0xf0] sm:$0xff]
    %v178 = vld [vmem:[#allocation8 + $0xf8] sm:$0xff]
    %v179 = vld [vmem:[%s4] sm:$0x3]
    %v181 = vlaneseq
    %v182 = vshrl.u32 %v181, 7
    %v183 = vsub.s32 0, %v182
    %v184 = vrot.slane %v179, %v183
    %v185 = vlaneseq
    %v186 = vshrl.u32 %v185, 7
    %v187 = vsub.s32 1, %v186
    %v188 = vrot.slane %v179, %v187
    %v223 = vunpack.c.l.b16 %v147
    %v224 = vunpack.c.h.b16 %v147
    %v225 = vunpack.c.l.b16 %v148
    %v226 = vunpack.c.h.b16 %v148
    %v227 = vunpack.c.l.b16 %v149
    %v228 = vunpack.c.h.b16 %v149
    %v229 = vunpack.c.l.b16 %v150
    %v230 = vunpack.c.h.b16 %v150
    %v231 = vunpack.c.l.b16 %v151
    %v232 = vunpack.c.h.b16 %v151
    %v233 = vunpack.c.l.b16 %v152
    %v234 = vunpack.c.h.b16 %v152
    %v235 = vunpack.c.l.b16 %v153
    %v236 = vunpack.c.h.b16 %v153
    %v237 = vunpack.c.l.b16 %v154
    %v238 = vunpack.c.h.b16 %v154
    %v239 = vunpack.c.l.b16 %v155
    %v240 = vunpack.c.h.b16 %v155
    %v241 = vunpack.c.l.b16 %v156
    %v242 = vunpack.c.h.b16 %v156
    %v243 = vunpack.c.l.b16 %v157
    %v244 = vunpack.c.h.b16 %v157
    %v245 = vunpack.c.l.b16 %v158
    %v246 = vunpack.c.h.b16 %v158
    %v247 = vunpack.c.l.b16 %v159
    %v248 = vunpack.c.h.b16 %v159
    %v249 = vunpack.c.l.b16 %v160
    %v250 = vunpack.c.h.b16 %v160
    %v251 = vunpack.c.l.b16 %v161
    %v252 = vunpack.c.h.b16 %v161
    %v253 = vunpack.c.l.b16 %v162
    %v254 = vunpack.c.h.b16 %v162
    %v255 = vunpack.c.l.b16 %v163
    %v256 = vunpack.c.h.b16 %v163
    %v257 = vunpack.c.l.b16 %v164
    %v258 = vunpack.c.h.b16 %v164
    %v259 = vunpack.c.l.b16 %v165
    %v260 = vunpack.c.h.b16 %v165
    %v261 = vunpack.c.l.b16 %v166
    %v262 = vunpack.c.h.b16 %v166
    %v263 = vunpack.c.l.b16 %v167
    %v264 = vunpack.c.h.b16 %v167
    %v265 = vunpack.c.l.b16 %v168
    %v266 = vunpack.c.h.b16 %v168
    %v267 = vunpack.c.l.b16 %v169
    %v268 = vunpack.c.h.b16 %v169
    %v269 = vunpack.c.l.b16 %v170
    %v270 = vunpack.c.h.b16 %v170
    %v271 = vunpack.c.l.b16 %v171
    %v272 = vunpack.c.h.b16 %v171
    %v273 = vunpack.c.l.b16 %v172
    %v274 = vunpack.c.h.b16 %v172
    %v275 = vunpack.c.l.b16 %v173
    %v276 = vunpack.c.h.b16 %v173
    %v277 = vunpack.c.l.b16 %v174
    %v278 = vunpack.c.h.b16 %v174
    %v279 = vunpack.c.l.b16 %v175
    %v280 = vunpack.c.h.b16 %v175
    %v281 = vunpack.c.l.b16 %v176
    %v282 = vunpack.c.h.b16 %v176
    %v283 = vunpack.c.l.b16 %v177
    %v284 = vunpack.c.h.b16 %v177
    %v285 = vunpack.c.l.b16 %v178
    %v286 = vunpack.c.h.b16 %v178
    %v287 = vpack.c.b16 %v225, %v223
    %v288 = vpack.c.b16 %v226, %v224
    %v289 = vpack.c.b16 %v229, %v227
    %v290 = vpack.c.b16 %v230, %v228
    %v291 = vpack.c.b16 %v233, %v231
    %v292 = vpack.c.b16 %v234, %v232
    %v293 = vpack.c.b16 %v237, %v235
    %v294 = vpack.c.b16 %v238, %v236
    %v295 = vpack.c.b16 %v241, %v239
    %v296 = vpack.c.b16 %v242, %v240
    %v297 = vpack.c.b16 %v245, %v243
    %v298 = vpack.c.b16 %v246, %v244
    %v299 = vpack.c.b16 %v249, %v247
    %v300 = vpack.c.b16 %v250, %v248
    %v301 = vpack.c.b16 %v253, %v251
    %v302 = vpack.c.b16 %v254, %v252
    %v303 = vpack.c.b16 %v257, %v255
    %v304 = vpack.c.b16 %v258, %v256
    %v305 = vpack.c.b16 %v261, %v259
    %v306 = vpack.c.b16 %v262, %v260
    %v307 = vpack.c.b16 %v265, %v263
    %v308 = vpack.c.b16 %v266, %v264
    %v309 = vpack.c.b16 %v269, %v267
    %v310 = vpack.c.b16 %v270, %v268
    %v311 = vpack.c.b16 %v273, %v271
    %v312 = vpack.c.b16 %v274, %v272
    %v313 = vpack.c.b16 %v277, %v275
    %v314 = vpack.c.b16 %v278, %v276
    %v315 = vpack.c.b16 %v281, %v279
    %v316 = vpack.c.b16 %v282, %v280
    %v317 = vpack.c.b16 %v285, %v283
    %v318 = vpack.c.b16 %v286, %v284
    %351 = vmatprep.subr.bf16.mxu0 %v288
    %352 = vmatpush1.bf16.msra.mxu0 %v287
    %353 = vmatprep.subr.bf16.mxu0 %v290
    %354 = vmatpush1.bf16.msra.mxu0 %v289
    %355 = vmatprep.subr.bf16.mxu0 %v292
    %356 = vmatpush1.bf16.msra.mxu0 %v291
    %357 = vmatprep.subr.bf16.mxu0 %v294
    %358 = vmatpush1.bf16.msra.mxu0 %v293
    %359 = vmatprep.subr.bf16.mxu0 %v296
    %360 = vmatpush1.bf16.msra.mxu0 %v295
    %361 = vmatprep.subr.bf16.mxu0 %v298
    %362 = vmatpush1.bf16.msra.mxu0 %v297
    %363 = vmatprep.subr.bf16.mxu0 %v300
    %364 = vmatpush1.bf16.msra.mxu0 %v299
    %365 = vmatprep.subr.bf16.mxu0 %v302
    %366 = vmatpush1.bf16.msra.mxu0 %v301
    %367 = vmatprep.subr.bf16.mxu0 %v304
    %368 = vmatpush1.bf16.msra.mxu0 %v303
    %369 = vmatprep.subr.bf16.mxu0 %v306
    %370 = vmatpush1.bf16.msra.mxu0 %v305
    %371 = vmatprep.subr.bf16.mxu0 %v308
    %372 = vmatpush1.bf16.msra.mxu0 %v307
    %373 = vmatprep.subr.bf16.mxu0 %v310
    %374 = vmatpush1.bf16.msra.mxu0 %v309
    %375 = vmatprep.subr.bf16.mxu0 %v312
    %376 = vmatpush1.bf16.msra.mxu0 %v311
    %377 = vmatprep.subr.bf16.mxu0 %v314
    %378 = vmatpush1.bf16.msra.mxu0 %v313
    %379 = vmatprep.subr.bf16.mxu0 %v316
    %380 = vmatpush1.bf16.msra.mxu0 %v315
    %381 = vmatprep.subr.bf16.mxu0 %v318
    %382 = vmatpush1.bf16.msra.mxu0 %v317
    %383 = vmatprep.mubr.bf16.mxu0 %v146
    %384 = vmatmul.mubr.bf16.gmra.mrb[0].mxu0 %v145
    %v385 = vpop.f32.mrb[0].mxu0
    %v386 = vadd.f32 %v184, %v385
    %v387 = vpop.f32.mrb[0].mxu0
    %v388 = vadd.f32 %v188, %v387
    %v389 = vpop.f32.mrb[0].mxu0
    %v390 = vpop.f32.mrb[0].mxu0
    %391 = vdwg.mxu0
    %v392 = vmax.f32 %v386, 0.0
    %v393 = vmax.f32 %v388, 0.0
    %v394 = vld [vmem:[%s5] sm:$0x3]
    %v396 = vlaneseq
    %v397 = vshrl.u32 %v396, 7
    %v398 = vsub.s32 0, %v397
    %v399 = vrot.slane %v394, %v398
    %v400 = vlaneseq
    %v401 = vshrl.u32 %v400, 7
    %v402 = vsub.s32 1, %v401
    %v403 = vrot.slane %v394, %v402
    %v406 = vmul.f32 %v392, %v399
    %v407 = vmul.f32 %v393, %v403
    %v408 = vadd.f32 %v406, %v407
    %409 = vadd.xlane.f32.xlu0 %v408
    %v410 = vpop.xlane.xlu0 %409
    %s411 = sld [smem:[#allocation2]]
    %v412 = vstv %s411
    %v413 = vadd.f32 %v410, %v412
    %v415 = vlaneseq
    %v416 = vand.u32 %v415, 127
    %v417 = vlaneseq
    %v418 = vshrl.u32 %v417, 7
    %v419 = vsub.s32 %v416, %v418
    %v420 = vrot.slane %v413, %v419
    %vm422 = vcmask 57344
    %423 = vst.msk [vmem:[#allocation9] sm:$0x1] %vm422, %v420
    // Predicated region
    $region42: #{tpu_custom_call.1} parent=1 // pred_check
      _
    $region43: #{tpu_custom_call.1} parent=1 // pred_check_branch
      %425 = sbr.rel (0) target = $region45
    $region44: #{tpu_custom_call.1} parent=1 // pred_region
      %s427 = ssub.s32 16, 16
      %428 = vsyncadd [#allocation5], %s427
      %s430 = sshll.u32 [#allocation9], 4
      %s431 = int_to_ptr.vmem [resolvable:$true] %s430
      %433 = dma.vmem_to_hbm [thread:$0]  %s431, 16, %s7, [#allocation5]
    $region45: #{tpu_custom_call.1} parent=1 // pred_fallthru
      _
    // Predicated region
    $region46: #{tpu_custom_call.1} parent=1 // pred_check
      _
    $region47: #{tpu_custom_call.1} parent=1 // pred_check_branch
      %435 = sbr.rel (0) target = $region49
    $region48: #{tpu_custom_call.1} parent=1 // pred_region
      %436 = dma.done [#allocation5], 16
    $region49: #{tpu_custom_call.1} parent=1 // pred_fallthru
      _
    %437 = vsyncpa [#allocation4], 1
    %438 = vsyncpa [#allocation7], 1
    %439 = vsyncpa [#allocation5], 1

</llo_original>
